<compile_context>
chip_gen: v7x
topology: tpu7x:2x2x1
jax: 0.10.0
libtpu: 0.0.40
codegen_flags: <defaults>
</compile_context>

<pallas_src>
import functools

import jax
import jax.numpy as jnp
from jax.experimental import pallas as pl
from jax.experimental.pallas import tpu as pltpu

_SEVERITY = 0.2   # get_random_mask(severity=0.2)
_MEAN = 0.0       # add_gaussian_noise(mean=0, std=0.2)
_STD = 0.2

_LANES = 128
_LANE_SHIFT = 7                      # log2(_LANES)
_DEFAULT_TILE_ROWS = 4096            # 4096 x 128 f32 = 2 MiB per tile

_ROTS = (13, 15, 26, 6, 17, 29, 16, 24)   # Threefry-2x32 rotation constants


def _i32(v):
    """Python int -> int32 constant with uint32 wrap semantics."""
    v &= 0xFFFFFFFF
    if v >= 1 << 31:
        v -= 1 << 32
    return jnp.int32(v)


def _srl(v, s):
    """Logical right shift of int32 by static s (arithmetic shift + mask)."""
    return (v >> s) & _i32((1 << (32 - s)) - 1)


def _rotl(v, s):
    return (v << s) | _srl(v, 32 - s)


def _threefry_stream(c0, c1, k0, k1, snapshots):
    """Reduced-round Threefry-2x32 ARX chain (int32 add/xor/shift only).

    Runs max(snapshots) rounds and returns the (x0, x1) state after each
    round listed in `snapshots`.  The chain is keyed (injection every 4
    rounds); successive snapshots taken >= 4 rounds apart are used as
    effectively independent 64-bit draws.  This gives 12 uniforms for the
    gaussian path at 16 total rounds instead of 3 fresh 8-round hashes
    (24 rounds) -- a sizable VALU saving since the kernel is compute-bound.
    """
    ks = (k0, k1, k0 ^ k1 ^ _i32(0x1BD11BDA))
    x0 = c0 + k0
    x1 = c1 + k1
    out = []
    for i in range(max(snapshots)):
        x0 = x0 + x1
        x1 = _rotl(x1, _ROTS[i % 8])
        x1 = x1 ^ x0
        if (i + 1) % 4 == 0:
            j = (i + 1) // 4
            x0 = x0 + ks[j % 3]
            x1 = x1 + ks[(j + 1) % 3] + jnp.int32(j)
        if (i + 1) in snapshots:
            out.append((x0, x1))
    return out


def _flat_index(shape, row_offset):
    """Global element index for each element of the current (rows, 128) tile."""
    r = jax.lax.broadcasted_iota(jnp.int32, shape, 0) + row_offset
    c = jax.lax.broadcasted_iota(jnp.int32, shape, 1)
    return (r << _LANE_SHIFT) | c


def _mask_kernel(seed_ref, x_ref, o_ref, *, severity, tile_rows):
    """noise_mode == 0: drop features with probability `severity`."""
    k0 = seed_ref[0]
    k1 = k0 ^ _i32(0x243F6A88)
    idx = _flat_index(x_ref.shape, pl.program_id(0) * tile_rows)
    (w0, _), = _threefry_stream(idx, jnp.int32(1), k0, k1, snapshots=(8,))
    # Integer-domain compare of the high 16 bits against floor(sev*2^16 + .5):
    # avoids an int->float cast and a float compare per element.
    thresh = _i32(int(severity * 65536.0 + 0.5))
    drop = _srl(w0, 16) < thresh
    xv = x_ref[...]
    o_ref[...] = jnp.where(drop, jnp.zeros_like(xv), xv)


def _gauss_kernel(seed_ref, x_ref, o_ref, *, mean, std, tile_rows):
    """noise_mode == 1: add N(mean, std^2) noise to the features."""
    k0 = seed_ref[0]
    k1 = k0 ^ _i32(0x243F6A88)
    idx = _flat_index(x_ref.shape, pl.program_id(0) * tile_rows)
    # Irwin-Hall(12) approximation of N(0,1): sum of 12 U(0,1) minus 6,
    # bounded at +-6 sigma.  The twelve 16-bit fields come from one keyed
    # ARX chain (rounds 8/12/16).  Accumulate in int32 (max 12*65535 < 2^20,
    # no overflow) and convert to float exactly once.
    # TODO(synk): exact torch.randn_like (Box-Muller) needs log/cos; the
    # Irwin-Hall approximation is intentional.
    snaps = _threefry_stream(idx, jnp.int32(2), k0, k1, snapshots=(8, 12, 16))
    acc = jnp.zeros(x_ref.shape, jnp.int32)
    for (w0, w1) in snaps:
        for w in (w0, w1):
            acc = acc + _srl(w, 16) + (w & _i32(0xFFFF))
    z = acc.astype(jnp.float32) * (1.0 / 65536.0) - 6.0
    o_ref[...] = (x_ref[...].astype(jnp.float32) + (z * std + mean)).astype(o_ref.dtype)


def _round_up(v, m):
    return ((v + m - 1) // m) * m


def masked_features(x, noise_mode, seed=0, tile_rows=_DEFAULT_TILE_ROWS):
    """Pallas equivalent of Masked_features.forward(x, noise_mode)."""
    orig_shape = x.shape
    dtype = x.dtype
    n = x.size

    # Lane-dense slab: flatten to (rows, 128) so every store is a full vst.
    sub = max(8, 32 // jnp.dtype(dtype).itemsize)      # (8,128) f32 / (16,128) bf16 tiles
    rows_needed = pl.cdiv(n, _LANES)
    tr = _round_up(min(tile_rows, _round_up(rows_needed, sub)), sub)
    rows = _round_up(rows_needed, tr)
    pad = rows * _LANES - n

    flat = x.reshape(-1)
    if pad:
        flat = jnp.concatenate([flat, jnp.zeros((pad,), dtype)])
    slab = flat.reshape(rows, _LANES)

    if noise_mode == 0:
        kernel = functools.partial(_mask_kernel, severity=_SEVERITY, tile_rows=tr)
    elif noise_mode == 1:
        kernel = functools.partial(_gauss_kernel, mean=_MEAN, std=_STD, tile_rows=tr)
    else:
        raise ValueError("noise_mode must be 0 or 1")

    seed_arr = jnp.asarray([seed], dtype=jnp.int32)

    out = pl.pallas_call(
        kernel,
        out_shape=jax.ShapeDtypeStruct((rows, _LANES), dtype),
        grid_spec=pltpu.PrefetchScalarGridSpec(
            num_scalar_prefetch=1,                      # seed lives in SMEM
            grid=(rows // tr,),
            in_specs=[pl.BlockSpec((tr, _LANES), lambda i, seed: (i, 0))],
            out_specs=pl.BlockSpec((tr, _LANES), lambda i, seed: (i, 0)),
        ),
        compiler_params=pltpu.CompilerParams(
            dimension_semantics=("parallel",),          # shard row tiles across TCs
            vmem_limit_bytes=32 * 1024 * 1024,          # 4x 2MiB buffers << 32MiB
        ),
    )(seed_arr, slab)

    return out.reshape(-1)[:n].reshape(orig_shape)


if __name__ == "__main__":
    key = jax.random.PRNGKey(0)
    batch, feat_dim = 8, 256
    x = jax.random.normal(key, (batch, feat_dim), dtype=jnp.float32)

    # noise_mode = 0 : random masking with severity 0.2
    out_mask = masked_features(x, noise_mode=0, seed=0)
    # noise_mode = 1 : additive Gaussian noise, mean 0, std 0.2
    out_gauss = masked_features(x, noise_mode=1, seed=1)
    # Non-128-multiple shape exercising the padding / lane-dense reshape path.
    x_odd = jax.random.normal(jax.random.PRNGKey(1), (3, 50), dtype=jnp.float32)
    out_odd = masked_features(x_odd, noise_mode=0, seed=2)

    jax.block_until_ready((out_mask, out_gauss, out_odd))

    assert out_mask.shape == x.shape and out_mask.dtype == x.dtype
    assert out_gauss.shape == x.shape and out_gauss.dtype == x.dtype
    assert out_odd.shape == x_odd.shape and out_odd.dtype == x_odd.dtype

    # Mask path: every output entry is either 0 or exactly the input.
    assert bool(jnp.all(jnp.logical_or(out_mask == 0.0, out_mask == x)))
    assert bool(jnp.all(jnp.logical_or(out_odd == 0.0, out_odd == x_odd)))
    # Roughly `severity` of entries dropped (loose statistical bounds).
    drop_frac = float(jnp.mean((out_mask == 0.0) & (x != 0.0)))
    assert 0.05 < drop_frac < 0.45, drop_frac
    # Gaussian path: non-trivial, bounded perturbation (|z| <= 6 by construction).
    max_delta = float(jnp.max(jnp.abs(out_gauss - x)))
    assert 0.0 < max_delta <= 6.05 * _STD, max_delta

    print("KERNEL_OK")
</pallas_src>

<mosaic_0001>
module attributes {stable_mosaic.version = 11 : i64} {
  func.func @_mask_kernel(%arg0: i32, %arg1: memref<1xi32, #tpu.memory_space<smem>>, %arg2: memref<16x128xf32, #tpu.memory_space<vmem>>, %arg3: memref<16x128xf32, #tpu.memory_space<vmem>>) attributes {dimension_semantics = [#tpu.dimension_semantics<parallel>], iteration_bounds = array<i64: 1>, scalar_prefetch = 1 : i64, scratch_operands = 0 : i64, tpu.core_type = #tpu.core_type<tc>, window_params = [{transform_indices = @transform_0, window_bounds = array<i64: 16, 128>}, {transform_indices = @transform_1, window_bounds = array<i64: 16, 128>}]} {
    %c0 = arith.constant 0 : index
    %0 = memref.load %arg1[%c0] : memref<1xi32, #tpu.memory_space<smem>>
    %c608135816_i32 = arith.constant 608135816 : i32
    %1 = arith.xori %0, %c608135816_i32 : i32
    %c16_i32 = arith.constant 16 : i32
    %2 = arith.muli %arg0, %c16_i32 : i32
    %3 = tpu.iota {dimensions = array<i32: 0>} : vector<16x128xi32>
    %4 = vector.broadcast %2 : i32 to vector<16x128xi32>
    %5 = arith.addi %3, %4 : vector<16x128xi32>
    %6 = tpu.iota {dimensions = array<i32: 1>} : vector<16x128xi32>
    %c7_i32 = arith.constant 7 : i32
    %7 = vector.broadcast %c7_i32 : i32 to vector<16x128xi32>
    %8 = arith.shli %5, %7 : vector<16x128xi32>
    %9 = arith.ori %8, %6 : vector<16x128xi32>
    %10 = arith.xori %0, %1 : i32
    %c466688986_i32 = arith.constant 466688986 : i32
    %11 = arith.xori %10, %c466688986_i32 : i32
    %12 = vector.broadcast %0 : i32 to vector<16x128xi32>
    %13 = arith.addi %9, %12 : vector<16x128xi32>
    %c1_i32 = arith.constant 1 : i32
    %14 = arith.addi %c1_i32, %1 : i32
    %15 = vector.broadcast %14 : i32 to vector<16x128xi32>
    %16 = arith.addi %13, %15 : vector<16x128xi32>
    %c13_i32 = arith.constant 13 : i32
    %17 = arith.shli %14, %c13_i32 : i32
    %c19_i32 = arith.constant 19 : i32
    %18 = arith.shrsi %14, %c19_i32 : i32
    %c8191_i32 = arith.constant 8191 : i32
    %19 = arith.andi %18, %c8191_i32 : i32
    %20 = arith.ori %17, %19 : i32
    %21 = vector.broadcast %20 : i32 to vector<16x128xi32>
    %22 = arith.xori %21, %16 : vector<16x128xi32>
    %23 = arith.addi %16, %22 : vector<16x128xi32>
    %c15_i32 = arith.constant 15 : i32
    %24 = vector.broadcast %c15_i32 : i32 to vector<16x128xi32>
    %25 = arith.shli %22, %24 : vector<16x128xi32>
    %c17_i32 = arith.constant 17 : i32
    %26 = vector.broadcast %c17_i32 : i32 to vector<16x128xi32>
    %27 = arith.shrsi %22, %26 : vector<16x128xi32>
    %c32767_i32 = arith.constant 32767 : i32
    %28 = vector.broadcast %c32767_i32 : i32 to vector<16x128xi32>
    %29 = arith.andi %27, %28 : vector<16x128xi32>
    %30 = arith.ori %25, %29 : vector<16x128xi32>
    %31 = arith.xori %30, %23 : vector<16x128xi32>
    %32 = arith.addi %23, %31 : vector<16x128xi32>
    %c26_i32 = arith.constant 26 : i32
    %33 = vector.broadcast %c26_i32 : i32 to vector<16x128xi32>
    %34 = arith.shli %31, %33 : vector<16x128xi32>
    %c6_i32 = arith.constant 6 : i32
    %35 = vector.broadcast %c6_i32 : i32 to vector<16x128xi32>
    %36 = arith.shrsi %31, %35 : vector<16x128xi32>
    %c67108863_i32 = arith.constant 67108863 : i32
    %37 = vector.broadcast %c67108863_i32 : i32 to vector<16x128xi32>
    %38 = arith.andi %36, %37 : vector<16x128xi32>
    %39 = arith.ori %34, %38 : vector<16x128xi32>
    %40 = arith.xori %39, %32 : vector<16x128xi32>
    %41 = arith.addi %32, %40 : vector<16x128xi32>
    %c6_i32_0 = arith.constant 6 : i32
    %42 = vector.broadcast %c6_i32_0 : i32 to vector<16x128xi32>
    %43 = arith.shli %40, %42 : vector<16x128xi32>
    %c26_i32_1 = arith.constant 26 : i32
    %44 = vector.broadcast %c26_i32_1 : i32 to vector<16x128xi32>
    %45 = arith.shrsi %40, %44 : vector<16x128xi32>
    %c63_i32 = arith.constant 63 : i32
    %46 = vector.broadcast %c63_i32 : i32 to vector<16x128xi32>
    %47 = arith.andi %45, %46 : vector<16x128xi32>
    %48 = arith.ori %43, %47 : vector<16x128xi32>
    %49 = arith.xori %48, %41 : vector<16x128xi32>
    %50 = vector.broadcast %1 : i32 to vector<16x128xi32>
    %51 = arith.addi %41, %50 : vector<16x128xi32>
    %52 = vector.broadcast %11 : i32 to vector<16x128xi32>
    %53 = arith.addi %49, %52 : vector<16x128xi32>
    %c1_i32_2 = arith.constant 1 : i32
    %54 = vector.broadcast %c1_i32_2 : i32 to vector<16x128xi32>
    %55 = arith.addi %53, %54 : vector<16x128xi32>
    %56 = arith.addi %51, %55 : vector<16x128xi32>
    %c17_i32_3 = arith.constant 17 : i32
    %57 = vector.broadcast %c17_i32_3 : i32 to vector<16x128xi32>
    %58 = arith.shli %55, %57 : vector<16x128xi32>
    %c15_i32_4 = arith.constant 15 : i32
    %59 = vector.broadcast %c15_i32_4 : i32 to vector<16x128xi32>
    %60 = arith.shrsi %55, %59 : vector<16x128xi32>
    %c131071_i32 = arith.constant 131071 : i32
    %61 = vector.broadcast %c131071_i32 : i32 to vector<16x128xi32>
    %62 = arith.andi %60, %61 : vector<16x128xi32>
    %63 = arith.ori %58, %62 : vector<16x128xi32>
    %64 = arith.xori %63, %56 : vector<16x128xi32>
    %65 = arith.addi %56, %64 : vector<16x128xi32>
    %c29_i32 = arith.constant 29 : i32
    %66 = vector.broadcast %c29_i32 : i32 to vector<16x128xi32>
    %67 = arith.shli %64, %66 : vector<16x128xi32>
    %c3_i32 = arith.constant 3 : i32
    %68 = vector.broadcast %c3_i32 : i32 to vector<16x128xi32>
    %69 = arith.shrsi %64, %68 : vector<16x128xi32>
    %c536870911_i32 = arith.constant 536870911 : i32
    %70 = vector.broadcast %c536870911_i32 : i32 to vector<16x128xi32>
    %71 = arith.andi %69, %70 : vector<16x128xi32>
    %72 = arith.ori %67, %71 : vector<16x128xi32>
    %73 = arith.xori %72, %65 : vector<16x128xi32>
    %74 = arith.addi %65, %73 : vector<16x128xi32>
    %c16_i32_5 = arith.constant 16 : i32
    %75 = vector.broadcast %c16_i32_5 : i32 to vector<16x128xi32>
    %76 = arith.shli %73, %75 : vector<16x128xi32>
    %c16_i32_6 = arith.constant 16 : i32
    %77 = vector.broadcast %c16_i32_6 : i32 to vector<16x128xi32>
    %78 = arith.shrsi %73, %77 : vector<16x128xi32>
    %c65535_i32 = arith.constant 65535 : i32
    %79 = vector.broadcast %c65535_i32 : i32 to vector<16x128xi32>
    %80 = arith.andi %78, %79 : vector<16x128xi32>
    %81 = arith.ori %76, %80 : vector<16x128xi32>
    %82 = arith.xori %81, %74 : vector<16x128xi32>
    %83 = arith.addi %74, %82 : vector<16x128xi32>
    %84 = vector.broadcast %11 : i32 to vector<16x128xi32>
    %85 = arith.addi %83, %84 : vector<16x128xi32>
    %c16_i32_7 = arith.constant 16 : i32
    %86 = vector.broadcast %c16_i32_7 : i32 to vector<16x128xi32>
    %87 = arith.shrsi %85, %86 : vector<16x128xi32>
    %c65535_i32_8 = arith.constant 65535 : i32
    %88 = vector.broadcast %c65535_i32_8 : i32 to vector<16x128xi32>
    %89 = arith.andi %87, %88 : vector<16x128xi32>
    %c13107_i32 = arith.constant 13107 : i32
    %90 = vector.broadcast %c13107_i32 : i32 to vector<16x128xi32>
    %91 = arith.cmpi slt, %89, %90 : vector<16x128xi32>
    %c0_9 = arith.constant 0 : index
    %c0_10 = arith.constant 0 : index
    %92 = vector.load %arg2[%c0_9, %c0_10] : memref<16x128xf32, #tpu.memory_space<vmem>>, vector<16x128xf32>
    %cst = arith.constant 0.000000e+00 : f32
    %93 = vector.broadcast %cst : f32 to vector<16x128xf32>
    %94 = arith.select %91, %93, %92 : vector<16x128xi1>, vector<16x128xf32>
    %c0_11 = arith.constant 0 : index
    %c0_12 = arith.constant 0 : index
    %95 = vector.load %arg3[%c0_11, %c0_12] : memref<16x128xf32, #tpu.memory_space<vmem>>, vector<16x128xf32>
    tpu.vector_store %arg3[%c0_11, %c0_12], %94 {strides = array<i32>} : memref<16x128xf32, #tpu.memory_space<vmem>>, vector<16x128xf32>,
    return
  }
  func.func @transform_0(%arg0: i32, %arg1: memref<1xi32, #tpu.memory_space<smem>>) -> (i32, i32) {
    %c0_i32 = arith.constant 0 : i32
    %c0_i32_0 = arith.constant 0 : i32
    return %arg0, %c0_i32 : i32, i32
  }
  func.func @transform_1(%arg0: i32, %arg1: memref<1xi32, #tpu.memory_space<smem>>) -> (i32, i32) {
    %c0_i32 = arith.constant 0 : i32
    %c0_i32_0 = arith.constant 0 : i32
    return %arg0, %c0_i32 : i32, i32
  }
}

</mosaic_0001>

<llo_original>
// kernel: tpu_custom_call.1
$region0: #{tpu_custom_call.1}
  #allocation0 [shape = 'u32[]', space=smem, size = 0x4, offset = 0x4, fixed_abs, tag = 'smem constant byte address 0x4 - core index']
  #allocation1 [shape = 'u32[144,128]{1,0:T(1,128)}', space=vmem, size = 0x12000, scoped, tag = 'internal scratch']
  #allocation2 [shape = 's32[1]{0}', space=sflag, size = 0x4, scoped, tag = 'scoped memory for tpu_custom_call.1']
  #allocation3 [shape = 's32[1]{0:T(128)S(6)}', space=smem, size = 0x200, scoped, tag = 'prefetched SMEM operand 0']
  %s0 = inlined_call_operand.<no memory space> [shape: s32[1], index: 0, kind: input, shape index: {}]
  %s1 = inlined_call_operand.hbm [shape: f32[16,128], index: 1, kind: input, shape index: {}]
  %s2 = inlined_call_operand.hbm [shape: f32[16,128], index: 2, kind: output, shape index: {}]
  %s3 = sld [smem:[#allocation0]]
  $region18: #{tpu_custom_call.1} parent=0
    _
  %s5 = ssub.s32 1, %s3
  %s6 = scalar_select 0, %s5, %s3
  %7 = sst [smem:[#allocation3]] %s0
  $region1: #{tpu_custom_call.1} parent=0
    #allocation4 [shape = 'u8[8192]{0}', space=vmem, size = 0x2000, scoped, tag = 'input window, operand 1, single buffered']
    #allocation5 [shape = 's32[1]{0}', space=sflag, size = 0x4, scoped, tag = 'scoped memory for tpu_custom_call.1']
    #allocation6 [shape = 's32[1]{0}', space=sflag, size = 0x4, scoped, tag = 'scoped memory for tpu_custom_call.1']
    #allocation7 [shape = 'u8[8192]{0}', space=vmem, size = 0x2000, scoped, tag = 'output window, operand 0, single buffered']
    %8 = vsyncpa [#allocation5], 0
    %9 = vsyncpa [#allocation6], 0
    // Predicated region
    $region2: #{tpu_custom_call.1} parent=1 // pred_check
      _
    $region3: #{tpu_custom_call.1} parent=1 // pred_check_branch
      %11 = sbr.rel (0) target = $region5
    $region4: #{tpu_custom_call.1} parent=1 // pred_region
      %s13 = ssub.s32 256, 256
      %14 = vsyncadd [#allocation5], %s13
      %s15 = sshll.u32 [#allocation4], 4
      %s16 = int_to_ptr.vmem [resolvable:$true] %s15
      %21 = dma.hbm_to_vmem [thread:$0]  %s1, 256, %s16, [#allocation5], 128, 128, 8
    $region5: #{tpu_custom_call.1} parent=1 // pred_fallthru
      _
    // Predicated region
    $region6: #{tpu_custom_call.1} parent=1 // pred_check
      _
    $region7: #{tpu_custom_call.1} parent=1 // pred_check_branch
      %23 = sbr.rel (0) target = $region9
    $region8: #{tpu_custom_call.1} parent=1 // pred_region
      %24 = dma.done [#allocation5], 256
    $region9: #{tpu_custom_call.1} parent=1 // pred_fallthru
      _
    %s25 = sld [smem:[#allocation3]]
    %s26 = sxor.u32 %s25, 608135816
    %s27 = smul.u32 0, 16
    %v28 = vlaneseq
    %v29 = vshrl.u32 %v28, 7
    %v30 = vadd.s32 %v29, 8
    %v31 = vstv %s27
    %v32 = vadd.s32 %v29, %v31
    %v33 = vadd.s32 %v30, %v31
    %v34 = vlaneseq
    %v35 = vand.u32 %v34, 127
    %v36 = vshll.u32 %v32, 7
    %v37 = vshll.u32 %v33, 7
    %v38 = vor.u32 %v36, %v35
    %v39 = vor.u32 %v37, %v35
    %v40 = vstv %s25
    %v41 = vadd.s32 %v38, %v40
    %v42 = vadd.s32 %v39, %v40
    %s43 = sadd.s32 %s26, 1
    %v44 = vstv %s43
    %v45 = vadd.s32 %v41, %v44
    %v46 = vadd.s32 %v42, %v44
    %s47 = sshll.u32 %s43, 13
    %s48 = sshra.s32 %s43, 19
    %s49 = sand.u32 %s48, 8191
    %s50 = sor.u32 %s47, %s49
    %v51 = vstv %s50
    %v52 = vxor.u32 %v51, %v45
    %v53 = vxor.u32 %v51, %v46
    %v54 = vadd.s32 %v45, %v52
    %v55 = vadd.s32 %v46, %v53
    %v56 = vshll.u32 %v52, 15
    %v57 = vshll.u32 %v53, 15
    %v58 = vshra.s32 %v52, 17
    %v59 = vshra.s32 %v53, 17
    %v60 = vand.u32 %v58, 32767
    %v61 = vand.u32 %v59, 32767
    %v62 = vor.u32 %v56, %v60
    %v63 = vor.u32 %v57, %v61
    %v64 = vxor.u32 %v62, %v54
    %v65 = vxor.u32 %v63, %v55
    %v66 = vadd.s32 %v54, %v64
    %v67 = vadd.s32 %v55, %v65
    %v68 = vshll.u32 %v64, 26
    %v69 = vshll.u32 %v65, 26
    %v70 = vshra.s32 %v64, 6
    %v71 = vshra.s32 %v65, 6
    %v72 = vand.u32 %v70, 67108863
    %v73 = vand.u32 %v71, 67108863
    %v74 = vor.u32 %v68, %v72
    %v75 = vor.u32 %v69, %v73
    %v76 = vxor.u32 %v74, %v66
    %v77 = vxor.u32 %v75, %v67
    %v78 = vadd.s32 %v66, %v76
    %v79 = vadd.s32 %v67, %v77
    %v80 = vshll.u32 %v76, 6
    %v81 = vshll.u32 %v77, 6
    %v82 = vshra.s32 %v76, 26
    %v83 = vshra.s32 %v77, 26
    %v84 = vand.u32 %v82, 63
    %v85 = vand.u32 %v83, 63
    %v86 = vor.u32 %v80, %v84
    %v87 = vor.u32 %v81, %v85
    %v88 = vxor.u32 %v86, %v78
    %v89 = vxor.u32 %v87, %v79
    %v90 = vstv %s26
    %v91 = vadd.s32 %v78, %v90
    %v92 = vadd.s32 %v79, %v90
    %v93 = vadd.s32 %v88, 1072591186
    %v94 = vadd.s32 %v89, 1072591186
    %v95 = vadd.s32 %v93, 1
    %v96 = vadd.s32 %v94, 1
    %v97 = vadd.s32 %v91, %v95
    %v98 = vadd.s32 %v92, %v96
    %v99 = vshll.u32 %v95, 17
    %v100 = vshll.u32 %v96, 17
    %v101 = vshra.s32 %v95, 15
    %v102 = vshra.s32 %v96, 15
    %v103 = vand.u32 %v101, 131071
    %v104 = vand.u32 %v102, 131071
    %v105 = vor.u32 %v99, %v103
    %v106 = vor.u32 %v100, %v104
    %v107 = vxor.u32 %v105, %v97
    %v108 = vxor.u32 %v106, %v98
    %v109 = vadd.s32 %v97, %v107
    %v110 = vadd.s32 %v98, %v108
    %v111 = vshll.u32 %v107, 29
    %v112 = vshll.u32 %v108, 29
    %v113 = vshra.s32 %v107, 3
    %v114 = vshra.s32 %v108, 3
    %v115 = vand.u32 %v113, 536870911
    %v116 = vand.u32 %v114, 536870911
    %v117 = vor.u32 %v111, %v115
    %v118 = vor.u32 %v112, %v116
    %v119 = vxor.u32 %v117, %v109
    %v120 = vxor.u32 %v118, %v110
    %v121 = vadd.s32 %v109, %v119
    %v122 = vadd.s32 %v110, %v120
    %v123 = vshll.u32 %v119, 16
    %v124 = vshll.u32 %v120, 16
    %v125 = vshra.s32 %v119, 16
    %v126 = vshra.s32 %v120, 16
    %v127 = vand.u32 %v125, 65535
    %v128 = vand.u32 %v126, 65535
    %v129 = vor.u32 %v123, %v127
    %v130 = vor.u32 %v124, %v128
    %v131 = vxor.u32 %v129, %v121
    %v132 = vxor.u32 %v130, %v122
    %v133 = vadd.s32 %v121, %v131
    %v134 = vadd.s32 %v122, %v132
    %v135 = vadd.s32 %v133, 1072591186
    %v136 = vadd.s32 %v134, 1072591186
    %v137 = vshra.s32 %v135, 16
    %v138 = vshra.s32 %v136, 16
    %v139 = vand.u32 %v137, 65535
    %v140 = vand.u32 %v138, 65535
    %vm141 = vcmp.lt.s32.totalorder %v139, 13107
    %vm142 = vcmp.lt.s32.totalorder %v140, 13107
    %v143 = vld [vmem:[#allocation4] sm:$0xff]
    %v144 = vld [vmem:[#allocation4 + $0x8] sm:$0xff]
    %v145 = vsel %vm141, 0.0, %v143
    %v146 = vsel %vm142, 0.0, %v144
    %147 = vst [vmem:[#allocation7] sm:$0xff] %v145
    %148 = vst [vmem:[#allocation7 + $0x8] sm:$0xff] %v146
    // Predicated region
    $region10: #{tpu_custom_call.1} parent=1 // pred_check
      _
    $region11: #{tpu_custom_call.1} parent=1 // pred_check_branch
      %150 = sbr.rel (0) target = $region13
    $region12: #{tpu_custom_call.1} parent=1 // pred_region
      %s152 = ssub.s32 256, 256
      %153 = vsyncadd [#allocation6], %s152
      %s154 = sshll.u32 [#allocation7], 4
      %s155 = int_to_ptr.vmem [resolvable:$true] %s154
      %160 = dma.vmem_to_hbm [thread:$0]  %s155, 256, %s2, [#allocation6], 128, 128, 8
    $region13: #{tpu_custom_call.1} parent=1 // pred_fallthru
      _
    // Predicated region
    $region14: #{tpu_custom_call.1} parent=1 // pred_check
      _
    $region15: #{tpu_custom_call.1} parent=1 // pred_check_branch
      %162 = sbr.rel (0) target = $region17
    $region16: #{tpu_custom_call.1} parent=1 // pred_region
      %163 = dma.done [#allocation6], 256
    $region17: #{tpu_custom_call.1} parent=1 // pred_fallthru
      _
    %164 = vsyncpa [#allocation5], 1
    %165 = vsyncpa [#allocation6], 1

</llo_original>
